<compile_context>
chip_gen: v7x
topology: tpu7x:2x2x1
jax: 0.10.0
libtpu: 0.0.40
codegen_flags: <defaults>
</compile_context>

<pallas_src>
import functools
import math

import jax
import jax.numpy as jnp
from jax import lax
from jax.experimental import pallas as pl
from jax.experimental.pallas import tpu as pltpu


_INV_SQRT2 = 0.7071067811865476


def _mlp_kernel(x_ref, w1_ref, b1_ref, w2_ref, b2_ref, o_ref, *, n_sub, sub_n):
    """One token tile of the MLP block.

    x_ref : (TILE_N, H)  token tile (compute dtype), streamed per grid step
    w1_ref: (H, M)       linear1 weight, pre-transposed, VMEM-resident
    b1_ref: (1, M)       f32
    w2_ref: (M, H)       linear2 weight, pre-transposed, VMEM-resident
    b2_ref: (1, H)       f32
    o_ref : (TILE_N, H)
    """
    w1 = w1_ref[...]
    b1 = b1_ref[...]
    w2 = w2_ref[...]
    b2 = b2_ref[...]

    # Statically-unrolled loop over independent token sub-chunks: the MXU
    # matmuls of one chunk overlap the VPU (exact-erf GELU) work of another.
    for s in range(n_sub):
        x = x_ref[pl.ds(s * sub_n, sub_n), :]

        # linear1: (sub_n, H) @ (H, M), f32 accumulation on the MXU.
        h = jnp.dot(x, w1, preferred_element_type=jnp.float32) + b1
        # exact GELU (matches torch.nn.GELU(approximate='none')), kept in f32.
        h = 0.5 * h * (1.0 + lax.erf(h * jnp.float32(_INV_SQRT2)))
        # drop1: dropout_rate = 0.0 -> identity.

        # linear2: feed the MXU in the compute dtype again, f32 accumulation.
        y = jnp.dot(h.astype(w2.dtype), w2, preferred_element_type=jnp.float32)
        y = y + b2
        # drop2: dropout_rate = 0.0 -> identity.
        o_ref[pl.ds(s * sub_n, sub_n), :] = y.astype(o_ref.dtype)


def _pick_subchunks(tile_n):
    # Split the token tile so MXU and VPU work of different sub-chunks can
    # overlap; keep each sub-chunk sublane-aligned and big enough for the MXU.
    for n_sub in (4, 2):
        sub_n = tile_n // n_sub
        if tile_n % n_sub == 0 and sub_n % 8 == 0 and sub_n >= 128:
            return n_sub, sub_n
    return 1, tile_n


def mlp_block(x, w1, b1, w2, b2, *, tile_n=1024, compute_dtype=jnp.bfloat16):
    """MLPBlock forward (act='GELU', dropout_rate=0.0, dropout_mode='vit').

    x : (..., H)            tokens
    w1: (M, H), b1: (M,)    linear1 in PyTorch (out_features, in_features) layout
    w2: (H, M), b2: (H,)    linear2 in PyTorch layout

    Performance note: production shapes should have H and M as multiples of
    128 (lane width); the toy shapes in __main__ run on masked lanes and are a
    correctness check only.  On v7x prefer tile_n=256-512 (64 MiB VMEM / TC).
    """
    # TODO(synk): the GEGLU activation variant and training-mode dropout are
    # not implemented (module defaults act='GELU', dropout_rate=0.0 are).
    H = x.shape[-1]
    M, H_in = w1.shape
    assert H_in == H and w2.shape == (H, M)
    assert b1.shape == (M,) and b2.shape == (H,)

    out_dtype = x.dtype
    lead_shape = x.shape[:-1]
    N = math.prod(lead_shape) if lead_shape else 1

    x2d = x.reshape(N, H).astype(compute_dtype)
    # One-time host-side transpose + cast (fused by XLA): both in-kernel dots
    # become canonical MXU contractions, no per-step weight relayout.
    w1t = w1.astype(compute_dtype).T                 # (H, M)
    w2t = w2.astype(compute_dtype).T                 # (M, H)
    b1_2d = b1.astype(jnp.float32).reshape(1, M)
    b2_2d = b2.astype(jnp.float32).reshape(1, H)

    # Token tiling: full extent for small inputs, otherwise an 8-aligned tile
    # with a ragged last block (Pallas masks out-of-range rows on writeback).
    if N <= tile_n:
        tile_n = N
    else:
        tile_n = max(8, (tile_n // 8) * 8)
    grid = (pl.cdiv(N, tile_n),)
    n_sub, sub_n = _pick_subchunks(tile_n)

    # VMEM budget: single-buffered resident weights + double-buffered x/out
    # tiles + per-sub-chunk intermediates (f32 act, compute-dtype copy, f32 y;
    # two sub-chunks in flight), with headroom; capped by the chip's VMEM.
    c_item = jnp.dtype(compute_dtype).itemsize
    o_item = jnp.dtype(out_dtype).itemsize
    try:
        vmem_cap = pltpu.get_tpu_info().vmem_capacity_bytes
    except Exception:  # conservative fallback = v7x per-TC capacity
        vmem_cap = 64 * 1024 * 1024
    weight_bytes = 2 * M * H * c_item + (M + H) * 4
    io_bytes = 2 * tile_n * H * (c_item + o_item)
    interm_bytes = 2 * sub_n * (M * (4 + c_item) + H * 4)
    vmem_limit = int(1.4 * (weight_bytes + io_bytes + interm_bytes))
    vmem_limit = max(vmem_limit, 32 * 1024 * 1024)
    vmem_limit = min(vmem_limit, vmem_cap - 2 * 1024 * 1024)

    cost = pl.CostEstimate(
        flops=4 * N * H * M,                                    # two matmuls
        transcendentals=N * M,                                  # erf per hidden elem
        bytes_accessed=N * H * (c_item + o_item) + 2 * M * H * c_item + (M + H) * 4,
    )

    kernel = functools.partial(_mlp_kernel, n_sub=n_sub, sub_n=sub_n)

    def run(single_buffer_weights):
        if single_buffer_weights:
            res_kwargs = {"pipeline_mode": pl.Buffered(1)}   # constant index_map
        else:
            res_kwargs = {}
        return pl.pallas_call(
            kernel,
            out_shape=jax.ShapeDtypeStruct((N, H), out_dtype),
            grid=grid,
            in_specs=[
                pl.BlockSpec((tile_n, H), lambda i: (i, 0)),                  # x (streamed)
                pl.BlockSpec((H, M), lambda i: (0, 0), **res_kwargs),         # w1^T (resident)
                pl.BlockSpec((1, M), lambda i: (0, 0), **res_kwargs),         # b1
                pl.BlockSpec((M, H), lambda i: (0, 0), **res_kwargs),         # w2^T (resident)
                pl.BlockSpec((1, H), lambda i: (0, 0), **res_kwargs),         # b2
            ],
            out_specs=pl.BlockSpec((tile_n, H), lambda i: (i, 0)),
            compiler_params=pltpu.CompilerParams(
                # Token tiles are independent: a parallel axis lets the runtime
                # shard the grid across both TensorCores on multi-TC parts.
                dimension_semantics=("parallel",),
                vmem_limit_bytes=vmem_limit,
            ),
            cost_estimate=cost,
        )(x2d, w1t, b1_2d, w2t, b2_2d)

    try:
        out2d = run(True)      # single-buffered resident weights (v7x VMEM)
    except Exception:
        out2d = run(False)     # fallback: default (double) buffering

    return out2d.reshape(*lead_shape, H)


def _init_linear(key, out_features, in_features, dtype=jnp.float32):
    # Deterministic init mimicking nn.Linear: U(-1/sqrt(fan_in), 1/sqrt(fan_in))
    kw, kb = jax.random.split(key)
    bound = 1.0 / math.sqrt(in_features)
    w = jax.random.uniform(kw, (out_features, in_features), dtype, -bound, bound)
    b = jax.random.uniform(kb, (out_features,), dtype, -bound, bound)
    return w, b


if __name__ == "__main__":
    hidden_size = 32
    mlp_dim = 64
    batch, seq = 2, 8

    key = jax.random.PRNGKey(0)
    kx, k1, k2 = jax.random.split(key, 3)

    x = jax.random.normal(kx, (batch, seq, hidden_size), jnp.float32)
    w1, b1 = _init_linear(k1, mlp_dim, hidden_size)      # linear1: hidden -> mlp_dim
    w2, b2 = _init_linear(k2, hidden_size, mlp_dim)      # linear2: mlp_dim -> hidden

    def ref_fwd(xv):
        h = jax.nn.gelu(xv @ w1.T + b1, approximate=False)
        return h @ w2.T + b2

    # torch-exact path: f32 operands, tight tolerance.
    out_f32 = mlp_block(x, w1, b1, w2, b2, compute_dtype=jnp.float32)
    jax.block_until_ready(out_f32)
    assert out_f32.shape == x.shape
    assert jnp.allclose(out_f32, ref_fwd(x), atol=1e-5, rtol=1e-5)

    # default bf16 operand policy (f32 accumulation) -- inference numerics.
    out_bf16 = mlp_block(x, w1, b1, w2, b2)
    jax.block_until_ready(out_bf16)
    assert jnp.allclose(out_bf16, ref_fwd(x), atol=5e-2, rtol=5e-2)

    # ragged token count + multi-block grid: exercises the masked last block
    # (no host-side padding) with a small tile.
    x_odd = jax.random.normal(kx, (batch, seq + 1, hidden_size), jnp.float32)
    out_odd = mlp_block(x_odd, w1, b1, w2, b2, tile_n=8, compute_dtype=jnp.float32)
    jax.block_until_ready(out_odd)
    assert out_odd.shape == x_odd.shape
    assert jnp.allclose(out_odd, ref_fwd(x_odd), atol=1e-5, rtol=1e-5)

    print("KERNEL_OK")
</pallas_src>

<mosaic_0001>
module attributes {stable_mosaic.version = 11 : i64} {
  func.func @_mlp_kernel(%arg0: i32, %arg1: memref<16x32xf32, #tpu.memory_space<vmem>>, %arg2: memref<32x64xf32, #tpu.memory_space<vmem>>, %arg3: memref<1x64xf32, #tpu.memory_space<vmem>>, %arg4: memref<64x32xf32, #tpu.memory_space<vmem>>, %arg5: memref<1x32xf32, #tpu.memory_space<vmem>>, %arg6: memref<16x32xf32, #tpu.memory_space<vmem>>) attributes {dimension_semantics = [#tpu.dimension_semantics<parallel>], iteration_bounds = array<i64: 1>, scalar_prefetch = 0 : i64, scratch_operands = 0 : i64, tpu.core_type = #tpu.core_type<tc>, window_params = [{transform_indices = @transform_0, window_bounds = array<i64: 16, 32>}, {pipeline_mode = #tpu.pipeline_mode<synchronous>, transform_indices = @transform_1, window_bounds = array<i64: 32, 64>}, {pipeline_mode = #tpu.pipeline_mode<synchronous>, transform_indices = @transform_2, window_bounds = array<i64: 1, 64>}, {pipeline_mode = #tpu.pipeline_mode<synchronous>, transform_indices = @transform_3, window_bounds = array<i64: 64, 32>}, {pipeline_mode = #tpu.pipeline_mode<synchronous>, transform_indices = @transform_4, window_bounds = array<i64: 1, 32>}, {transform_indices = @transform_5, window_bounds = array<i64: 16, 32>}]} {
    %c0 = arith.constant 0 : index
    %c0_0 = arith.constant 0 : index
    %0 = vector.load %arg2[%c0, %c0_0] : memref<32x64xf32, #tpu.memory_space<vmem>>, vector<32x64xf32>
    %c0_1 = arith.constant 0 : index
    %c0_2 = arith.constant 0 : index
    %1 = vector.load %arg3[%c0_1, %c0_2] : memref<1x64xf32, #tpu.memory_space<vmem>>, vector<1x64xf32>
    %c0_3 = arith.constant 0 : index
    %c0_4 = arith.constant 0 : index
    %2 = vector.load %arg4[%c0_3, %c0_4] : memref<64x32xf32, #tpu.memory_space<vmem>>, vector<64x32xf32>
    %c0_5 = arith.constant 0 : index
    %c0_6 = arith.constant 0 : index
    %3 = vector.load %arg5[%c0_5, %c0_6] : memref<1x32xf32, #tpu.memory_space<vmem>>, vector<1x32xf32>
    %c0_7 = arith.constant 0 : index
    %c0_8 = arith.constant 0 : index
    %4 = vector.load %arg1[%c0_7, %c0_8] : memref<16x32xf32, #tpu.memory_space<vmem>>, vector<16x32xf32>
    %cst = arith.constant dense<0.000000e+00> : vector<16x64xf32>
    %5 = tpu.matmul %4, %0, %cst {dimension_numbers = #tpu.dot_dimension_numbers<[1], [0], [0], [1], [0, 0, 1, 1], [], []>} : vector<16x32xf32>, vector<32x64xf32>, vector<16x64xf32> -> vector<16x64xf32>
    %6 = vector.broadcast %1 : vector<1x64xf32> to vector<16x64xf32>
    %7 = arith.addf %5, %6 : vector<16x64xf32>
    %cst_9 = arith.constant 5.000000e-01 : f32
    %8 = vector.broadcast %cst_9 : f32 to vector<16x64xf32>
    %9 = arith.mulf %8, %7 : vector<16x64xf32>
    %cst_10 = arith.constant 0.707106769 : f32
    %10 = vector.broadcast %cst_10 : f32 to vector<16x64xf32>
    %11 = arith.mulf %7, %10 : vector<16x64xf32>
    %12 = math.erf %11 : vector<16x64xf32>
    %cst_11 = arith.constant 1.000000e+00 : f32
    %13 = vector.broadcast %cst_11 : f32 to vector<16x64xf32>
    %14 = arith.addf %13, %12 : vector<16x64xf32>
    %15 = arith.mulf %9, %14 : vector<16x64xf32>
    %cst_12 = arith.constant dense<0.000000e+00> : vector<16x32xf32>
    %16 = tpu.matmul %15, %2, %cst_12 {dimension_numbers = #tpu.dot_dimension_numbers<[1], [0], [0], [1], [0, 0, 1, 1], [], []>} : vector<16x64xf32>, vector<64x32xf32>, vector<16x32xf32> -> vector<16x32xf32>
    %17 = vector.broadcast %3 : vector<1x32xf32> to vector<16x32xf32>
    %18 = arith.addf %16, %17 : vector<16x32xf32>
    %c0_13 = arith.constant 0 : index
    %c0_14 = arith.constant 0 : index
    %19 = vector.load %arg6[%c0_13, %c0_14] : memref<16x32xf32, #tpu.memory_space<vmem>>, vector<16x32xf32>
    tpu.vector_store %arg6[%c0_13, %c0_14], %18 {strides = array<i32>} : memref<16x32xf32, #tpu.memory_space<vmem>>, vector<16x32xf32>,
    return
  }
  func.func @transform_0(%arg0: i32) -> (i32, i32) {
    %c0_i32 = arith.constant 0 : i32
    %c0_i32_0 = arith.constant 0 : i32
    return %arg0, %c0_i32 : i32, i32
  }
  func.func @transform_1(%arg0: i32) -> (i32, i32) {
    %c0_i32 = arith.constant 0 : i32
    %c0_i32_0 = arith.constant 0 : i32
    %c0_i32_1 = arith.constant 0 : i32
    return %c0_i32, %c0_i32_0 : i32, i32
  }
  func.func @transform_2(%arg0: i32) -> (i32, i32) {
    %c0_i32 = arith.constant 0 : i32
    %c0_i32_0 = arith.constant 0 : i32
    %c0_i32_1 = arith.constant 0 : i32
    return %c0_i32, %c0_i32_0 : i32, i32
  }
  func.func @transform_3(%arg0: i32) -> (i32, i32) {
    %c0_i32 = arith.constant 0 : i32
    %c0_i32_0 = arith.constant 0 : i32
    %c0_i32_1 = arith.constant 0 : i32
    return %c0_i32, %c0_i32_0 : i32, i32
  }
  func.func @transform_4(%arg0: i32) -> (i32, i32) {
    %c0_i32 = arith.constant 0 : i32
    %c0_i32_0 = arith.constant 0 : i32
    %c0_i32_1 = arith.constant 0 : i32
    return %c0_i32, %c0_i32_0 : i32, i32
  }
  func.func @transform_5(%arg0: i32) -> (i32, i32) {
    %c0_i32 = arith.constant 0 : i32
    %c0_i32_0 = arith.constant 0 : i32
    return %arg0, %c0_i32 : i32, i32
  }
}

module attributes {stable_mosaic.version = 11 : i64} {
  func.func @_mlp_kernel(%arg0: i32, %arg1: memref<16x32xf32, #tpu.memory_space<vmem>>, %arg2: memref<32x64xf32, #tpu.memory_space<vmem>>, %arg3: memref<1x64xf32, #tpu.memory_space<vmem>>, %arg4: memref<64x32xf32, #tpu.memory_space<vmem>>, %arg5: memref<1x32xf32, #tpu.memory_space<vmem>>, %arg6: memref<16x32xf32, #tpu.memory_space<vmem>>) attributes {dimension_semantics = [#tpu.dimension_semantics<parallel>], iteration_bounds = array<i64: 1>, scalar_prefetch = 0 : i64, scratch_operands = 0 : i64, tpu.core_type = #tpu.core_type<tc>, window_params = [{transform_indices = @transform_0, window_bounds = array<i64: 16, 32>}, {pipeline_mode = #tpu.pipeline_mode<synchronous>, transform_indices = @transform_1, window_bounds = array<i64: 32, 64>}, {pipeline_mode = #tpu.pipeline_mode<synchronous>, transform_indices = @transform_2, window_bounds = array<i64: 1, 64>}, {pipeline_mode = #tpu.pipeline_mode<synchronous>, transform_indices = @transform_3, window_bounds = array<i64: 64, 32>}, {pipeline_mode = #tpu.pipeline_mode<synchronous>, transform_indices = @transform_4, window_bounds = array<i64: 1, 32>}, {transform_indices = @transform_5, window_bounds = array<i64: 16, 32>}]} {
    %c0 = arith.constant 0 : index
    %c0_0 = arith.constant 0 : index
    %0 = vector.load %arg2[%c0, %c0_0] : memref<32x64xf32, #tpu.memory_space<vmem>>, vector<32x64xf32>
    %c0_1 = arith.constant 0 : index
    %c0_2 = arith.constant 0 : index
    %1 = vector.load %arg3[%c0_1, %c0_2] : memref<1x64xf32, #tpu.memory_space<vmem>>, vector<1x64xf32>
    %c0_3 = arith.constant 0 : index
    %c0_4 = arith.constant 0 : index
    %2 = vector.load %arg4[%c0_3, %c0_4] : memref<64x32xf32, #tpu.memory_space<vmem>>, vector<64x32xf32>
    %c0_5 = arith.constant 0 : index
    %c0_6 = arith.constant 0 : index
    %3 = vector.load %arg5[%c0_5, %c0_6] : memref<1x32xf32, #tpu.memory_space<vmem>>, vector<1x32xf32>
    %c0_7 = arith.constant 0 : index
    %c0_8 = arith.constant 0 : index
    %4 = vector.load %arg1[%c0_7, %c0_8] : memref<16x32xf32, #tpu.memory_space<vmem>>, vector<16x32xf32>
    %cst = arith.constant dense<0.000000e+00> : vector<16x64xf32>
    %5 = tpu.matmul %4, %0, %cst {dimension_numbers = #tpu.dot_dimension_numbers<[1], [0], [0], [1], [0, 0, 1, 1], [], []>} : vector<16x32xf32>, vector<32x64xf32>, vector<16x64xf32> -> vector<16x64xf32>
    %6 = vector.broadcast %1 : vector<1x64xf32> to vector<16x64xf32>
    %7 = arith.addf %5, %6 : vector<16x64xf32>
    %cst_9 = arith.constant 5.000000e-01 : f32
    %8 = vector.broadcast %cst_9 : f32 to vector<16x64xf32>
    %9 = arith.mulf %8, %7 : vector<16x64xf32>
    %cst_10 = arith.constant 0.707106769 : f32
    %10 = vector.broadcast %cst_10 : f32 to vector<16x64xf32>
    %11 = arith.mulf %7, %10 : vector<16x64xf32>
    %12 = math.erf %11 : vector<16x64xf32>
    %cst_11 = arith.constant 1.000000e+00 : f32
    %13 = vector.broadcast %cst_11 : f32 to vector<16x64xf32>
    %14 = arith.addf %13, %12 : vector<16x64xf32>
    %15 = arith.mulf %9, %14 : vector<16x64xf32>
    %cst_12 = arith.constant dense<0.000000e+00> : vector<16x32xf32>
    %16 = tpu.matmul %15, %2, %cst_12 {dimension_numbers = #tpu.dot_dimension_numbers<[1], [0], [0], [1], [0, 0, 1, 1], [], []>} : vector<16x64xf32>, vector<64x32xf32>, vector<16x32xf32> -> vector<16x32xf32>
    %17 = vector.broadcast %3 : vector<1x32xf32> to vector<16x32xf32>
    %18 = arith.addf %16, %17 : vector<16x32xf32>
    %c0_13 = arith.constant 0 : index
    %c0_14 = arith.constant 0 : index
    %19 = vector.load %arg6[%c0_13, %c0_14] : memref<16x32xf32, #tpu.memory_space<vmem>>, vector<16x32xf32>
    tpu.vector_store %arg6[%c0_13, %c0_14], %18 {strides = array<i32>} : memref<16x32xf32, #tpu.memory_space<vmem>>, vector<16x32xf32>,
    return
  }
  func.func @transform_0(%arg0: i32) -> (i32, i32) {
    %c0_i32 = arith.constant 0 : i32
    %c0_i32_0 = arith.constant 0 : i32
    return %arg0, %c0_i32 : i32, i32
  }
  func.func @transform_1(%arg0: i32) -> (i32, i32) {
    %c0_i32 = arith.constant 0 : i32
    %c0_i32_0 = arith.constant 0 : i32
    %c0_i32_1 = arith.constant 0 : i32
    return %c0_i32, %c0_i32_0 : i32, i32
  }
  func.func @transform_2(%arg0: i32) -> (i32, i32) {
    %c0_i32 = arith.constant 0 : i32
    %c0_i32_0 = arith.constant 0 : i32
    %c0_i32_1 = arith.constant 0 : i32
    return %c0_i32, %c0_i32_0 : i32, i32
  }
  func.func @transform_3(%arg0: i32) -> (i32, i32) {
    %c0_i32 = arith.constant 0 : i32
    %c0_i32_0 = arith.constant 0 : i32
    %c0_i32_1 = arith.constant 0 : i32
    return %c0_i32, %c0_i32_0 : i32, i32
  }
  func.func @transform_4(%arg0: i32) -> (i32, i32) {
    %c0_i32 = arith.constant 0 : i32
    %c0_i32_0 = arith.constant 0 : i32
    %c0_i32_1 = arith.constant 0 : i32
    return %c0_i32, %c0_i32_0 : i32, i32
  }
  func.func @transform_5(%arg0: i32) -> (i32, i32) {
    %c0_i32 = arith.constant 0 : i32
    %c0_i32_0 = arith.constant 0 : i32
    return %arg0, %c0_i32 : i32, i32
  }
}

</mosaic_0001>

<llo_original>
// kernel: tpu_custom_call.1
$region0: #{tpu_custom_call.1}
  #allocation0 [shape = 'u32[]', space=smem, size = 0x4, offset = 0x4, fixed_abs, tag = 'smem constant byte address 0x4 - core index']
  #allocation1 [shape = 'u32[144,128]{1,0:T(1,128)}', space=vmem, size = 0x12000, scoped, tag = 'internal scratch']
  %s0 = inlined_call_operand.vmem [shape: f32[16,32], index: 0, kind: input, shape index: {}]
  %s1 = inlined_call_operand.vmem [shape: f32[32,64], index: 1, kind: input, shape index: {}]
  %s2 = inlined_call_operand.vmem [shape: f32[1,64], index: 2, kind: input, shape index: {}]
  %s3 = inlined_call_operand.vmem [shape: f32[64,32], index: 3, kind: input, shape index: {}]
  %s4 = inlined_call_operand.vmem [shape: f32[1,32], index: 4, kind: input, shape index: {}]
  %s5 = inlined_call_operand.hbm [shape: f32[16,32], index: 5, kind: output, shape index: {}]
  %s6 = sld [smem:[#allocation0]]
  $region30: #{tpu_custom_call.1} parent=0
    _
  %s8 = ssub.s32 1, %s6
  %s9 = scalar_select 0, %s8, %s6
  $region1: #{tpu_custom_call.1} parent=0
    #allocation2 [shape = 'u8[8192]{0}', space=vmem, size = 0x2000, scoped, tag = 'output window, operand 0, single buffered']
    #allocation3 [shape = 's32[1]{0}', space=sflag, size = 0x4, scoped, tag = 'scoped memory for tpu_custom_call.1']
    %10 = vsyncpa [#allocation3], 0
    // Predicated region
    $region2: #{tpu_custom_call.1} parent=1 // pred_check
      _
    $region3: #{tpu_custom_call.1} parent=1 // pred_check_branch
      %12 = sbr.rel (0) target = $region5
    $region4: #{tpu_custom_call.1} parent=1 // pred_region
      _
    $region5: #{tpu_custom_call.1} parent=1 // pred_fallthru
      _
    // Predicated region
    $region6: #{tpu_custom_call.1} parent=1 // pred_check
      _
    $region7: #{tpu_custom_call.1} parent=1 // pred_check_branch
      %14 = sbr.rel (0) target = $region9
    $region8: #{tpu_custom_call.1} parent=1 // pred_region
      _
    $region9: #{tpu_custom_call.1} parent=1 // pred_fallthru
      _
    // Predicated region
    $region10: #{tpu_custom_call.1} parent=1 // pred_check
      _
    $region11: #{tpu_custom_call.1} parent=1 // pred_check_branch
      %16 = sbr.rel (0) target = $region13
    $region12: #{tpu_custom_call.1} parent=1 // pred_region
      _
    $region13: #{tpu_custom_call.1} parent=1 // pred_fallthru
      _
    // Predicated region
    $region14: #{tpu_custom_call.1} parent=1 // pred_check
      _
    $region15: #{tpu_custom_call.1} parent=1 // pred_check_branch
      %18 = sbr.rel (0) target = $region17
    $region16: #{tpu_custom_call.1} parent=1 // pred_region
      _
    $region17: #{tpu_custom_call.1} parent=1 // pred_fallthru
      _
    // Predicated region
    $region18: #{tpu_custom_call.1} parent=1 // pred_check
      _
    $region19: #{tpu_custom_call.1} parent=1 // pred_check_branch
      %20 = sbr.rel (0) target = $region21
    $region20: #{tpu_custom_call.1} parent=1 // pred_region
      _
    $region21: #{tpu_custom_call.1} parent=1 // pred_fallthru
      _
    %v21 = vld [vmem:[%s1] sm:$0xff]
    %v22 = vld [vmem:[%s1 + $0x8] sm:$0xff]
    %v23 = vld [vmem:[%s1 + $0x10] sm:$0xff]
    %v24 = vld [vmem:[%s1 + $0x18] sm:$0xff]
    %v25 = vld [vmem:[%s2] sm:$0x1]
    %v26 = vld [vmem:[%s3] sm:$0xff]
    %v27 = vld [vmem:[%s3 + $0x8] sm:$0xff]
    %v28 = vld [vmem:[%s3 + $0x10] sm:$0xff]
    %v29 = vld [vmem:[%s3 + $0x18] sm:$0xff]
    %v30 = vld [vmem:[%s3 + $0x20] sm:$0xff]
    %v31 = vld [vmem:[%s3 + $0x28] sm:$0xff]
    %v32 = vld [vmem:[%s3 + $0x30] sm:$0xff]
    %v33 = vld [vmem:[%s3 + $0x38] sm:$0xff]
    %v34 = vld [vmem:[%s4] sm:$0x1]
    %v35 = vld [vmem:[%s0] sm:$0xff]
    %v36 = vld [vmem:[%s0 + $0x8] sm:$0xff]
    %v38 = vlaneseq
    %v39 = vshrl.u32 %v38, 7
    %v40 = vsub.s32 0, %v39
    %v41 = vrot.slane %v25, %v40
    %vm43 = vcmask 261120
    %v45 = vsel %vm43, %v35, 0
    %v48 = vsel %vm43, %v36, 0
    %50 = vmatprep.subr.mxu0 0.0
    %51 = vmatpush1.msra.mxu0 %v21
    %52 = vmatprep.subr.mxu0 0.0
    %53 = vmatpush1.msra.mxu0 %v22
    %54 = vmatprep.subr.mxu0 0.0
    %55 = vmatpush1.msra.mxu0 %v23
    %56 = vmatprep.subr.mxu0 0.0
    %57 = vmatpush1.msra.mxu0 %v24
    %58 = vmatprep.subr.mxu0 0.0
    %59 = vmatpush1.msra.mxu0 0.0
    %60 = vmatprep.subr.mxu0 0.0
    %61 = vmatpush1.msra.mxu0 0.0
    %62 = vmatprep.subr.mxu0 0.0
    %63 = vmatpush1.msra.mxu0 0.0
    %64 = vmatprep.subr.mxu0 0.0
    %65 = vmatpush1.msra.mxu0 0.0
    %66 = vmatprep.subr.mxu0 0.0
    %67 = vmatpush1.msra.mxu0 0.0
    %68 = vmatprep.subr.mxu0 0.0
    %69 = vmatpush1.msra.mxu0 0.0
    %70 = vmatprep.subr.mxu0 0.0
    %71 = vmatpush1.msra.mxu0 0.0
    %72 = vmatprep.subr.mxu0 0.0
    %73 = vmatpush1.msra.mxu0 0.0
    %74 = vmatprep.subr.mxu0 0.0
    %75 = vmatpush1.msra.mxu0 0.0
    %76 = vmatprep.subr.mxu0 0.0
    %77 = vmatpush1.msra.mxu0 0.0
    %78 = vmatprep.subr.mxu0 0.0
    %79 = vmatpush1.msra.mxu0 0.0
    %80 = vmatprep.subr.mxu0 0.0
    %81 = vmatpush1.msra.mxu0 0.0
    %82 = vmatprep.subr.mxu0 0.0
    %83 = vmatpush1.msra.mxu0 0.0
    %84 = vmatprep.subr.mxu0 0.0
    %85 = vmatpush1.msra.mxu0 0.0
    %86 = vmatprep.subr.mxu0 0.0
    %87 = vmatpush1.msra.mxu0 0.0
    %88 = vmatprep.subr.mxu0 0.0
    %89 = vmatpush1.msra.mxu0 0.0
    %90 = vmatprep.subr.mxu0 0.0
    %91 = vmatpush1.msra.mxu0 0.0
    %92 = vmatprep.subr.mxu0 0.0
    %93 = vmatpush1.msra.mxu0 0.0
    %94 = vmatprep.subr.mxu0 0.0
    %95 = vmatpush1.msra.mxu0 0.0
    %96 = vmatprep.subr.mxu0 0.0
    %97 = vmatpush1.msra.mxu0 0.0
    %98 = vmatprep.subr.mxu0 0.0
    %99 = vmatpush1.msra.mxu0 0.0
    %100 = vmatprep.subr.mxu0 0.0
    %101 = vmatpush1.msra.mxu0 0.0
    %102 = vmatprep.subr.mxu0 0.0
    %103 = vmatpush1.msra.mxu0 0.0
    %104 = vmatprep.subr.mxu0 0.0
    %105 = vmatpush1.msra.mxu0 0.0
    %106 = vmatprep.subr.mxu0 0.0
    %107 = vmatpush1.msra.mxu0 0.0
    %108 = vmatprep.subr.mxu0 0.0
    %109 = vmatpush1.msra.mxu0 0.0
    %110 = vmatprep.subr.mxu0 0.0
    %111 = vmatpush1.msra.mxu0 0.0
    %112 = vmatprep.subr.mxu0 0.0
    %113 = vmatpush1.msra.mxu0 0.0
    %114 = vmatprep.mubr.f32.mxu0 0.0
    %115 = vmatmul.mubr.f32.gmra.mrb[0].mxu0 %v45
    %v116 = vpop.f32.mrb[0].mxu0
    %v117 = vadd.f32 %v41, %v116
    %v118 = vpop.f32.mrb[0].mxu0
    %119 = vmatprep.mubr.f32.mxu0 0.0
    %120 = vmatmul.mubr.f32.gmra.mrb[0].mxu0 %v48
    %v121 = vpop.f32.mrb[0].mxu0
    %v122 = vadd.f32 %v41, %v121
    %v123 = vpop.f32.mrb[0].mxu0
    %124 = vdwg.mxu0
    %v125 = vmul.f32 %v117, 0.5
    %v126 = vmul.f32 %v122, 0.5
    %v127 = vmul.f32 %v117, 0.70710677
    %v128 = vmul.f32 %v122, 0.70710677
    %v129 = verf.f32.pop %v127
    %v130 = verf.f32.pop %v128
    %v131 = vadd.f32 %v129, 1.0
    %v132 = vadd.f32 %v130, 1.0
    %v133 = vmul.f32 %v125, %v131
    %v134 = vmul.f32 %v126, %v132
    %v136 = vlaneseq
    %v137 = vshrl.u32 %v136, 7
    %v138 = vsub.s32 0, %v137
    %v139 = vrot.slane %v34, %v138
    %vm141 = vcmask 523264
    %v143 = vsel %vm141, %v133, 0
    %v146 = vsel %vm141, %v134, 0
    %148 = vmatprep.subr.mxu0 0.0
    %149 = vmatpush1.msra.mxu0 %v26
    %150 = vmatprep.subr.mxu0 0.0
    %151 = vmatpush1.msra.mxu0 %v27
    %152 = vmatprep.subr.mxu0 0.0
    %153 = vmatpush1.msra.mxu0 %v28
    %154 = vmatprep.subr.mxu0 0.0
    %155 = vmatpush1.msra.mxu0 %v29
    %156 = vmatprep.subr.mxu0 0.0
    %157 = vmatpush1.msra.mxu0 %v30
    %158 = vmatprep.subr.mxu0 0.0
    %159 = vmatpush1.msra.mxu0 %v31
    %160 = vmatprep.subr.mxu0 0.0
    %161 = vmatpush1.msra.mxu0 %v32
    %162 = vmatprep.subr.mxu0 0.0
    %163 = vmatpush1.msra.mxu0 %v33
    %164 = vmatprep.subr.mxu0 0.0
    %165 = vmatpush1.msra.mxu0 0.0
    %166 = vmatprep.subr.mxu0 0.0
    %167 = vmatpush1.msra.mxu0 0.0
    %168 = vmatprep.subr.mxu0 0.0
    %169 = vmatpush1.msra.mxu0 0.0
    %170 = vmatprep.subr.mxu0 0.0
    %171 = vmatpush1.msra.mxu0 0.0
    %172 = vmatprep.subr.mxu0 0.0
    %173 = vmatpush1.msra.mxu0 0.0
    %174 = vmatprep.subr.mxu0 0.0
    %175 = vmatpush1.msra.mxu0 0.0
    %176 = vmatprep.subr.mxu0 0.0
    %177 = vmatpush1.msra.mxu0 0.0
    %178 = vmatprep.subr.mxu0 0.0
    %179 = vmatpush1.msra.mxu0 0.0
    %180 = vmatprep.subr.mxu0 0.0
    %181 = vmatpush1.msra.mxu0 0.0
    %182 = vmatprep.subr.mxu0 0.0
    %183 = vmatpush1.msra.mxu0 0.0
    %184 = vmatprep.subr.mxu0 0.0
    %185 = vmatpush1.msra.mxu0 0.0
    %186 = vmatprep.subr.mxu0 0.0
    %187 = vmatpush1.msra.mxu0 0.0
    %188 = vmatprep.subr.mxu0 0.0
    %189 = vmatpush1.msra.mxu0 0.0
    %190 = vmatprep.subr.mxu0 0.0
    %191 = vmatpush1.msra.mxu0 0.0
    %192 = vmatprep.subr.mxu0 0.0
    %193 = vmatpush1.msra.mxu0 0.0
    %194 = vmatprep.subr.mxu0 0.0
    %195 = vmatpush1.msra.mxu0 0.0
    %196 = vmatprep.subr.mxu0 0.0
    %197 = vmatpush1.msra.mxu0 0.0
    %198 = vmatprep.subr.mxu0 0.0
    %199 = vmatpush1.msra.mxu0 0.0
    %200 = vmatprep.subr.mxu0 0.0
    %201 = vmatpush1.msra.mxu0 0.0
    %202 = vmatprep.subr.mxu0 0.0
    %203 = vmatpush1.msra.mxu0 0.0
    %204 = vmatprep.subr.mxu0 0.0
    %205 = vmatpush1.msra.mxu0 0.0
    %206 = vmatprep.subr.mxu0 0.0
    %207 = vmatpush1.msra.mxu0 0.0
    %208 = vmatprep.subr.mxu0 0.0
    %209 = vmatpush1.msra.mxu0 0.0
    %210 = vmatprep.subr.mxu0 0.0
    %211 = vmatpush1.msra.mxu0 0.0
    %212 = vmatprep.mubr.f32.mxu0 0.0
    %213 = vmatmul.mubr.f32.gmra.mrb[0].mxu0 %v143
    %v214 = vpop.f32.mrb[0].mxu0
    %v215 = vadd.f32 %v139, %v214
    %v216 = vpop.f32.mrb[0].mxu0
    %217 = vmatprep.mubr.f32.mxu0 0.0
    %218 = vmatmul.mubr.f32.gmra.mrb[0].mxu0 %v146
    %v219 = vpop.f32.mrb[0].mxu0
    %v220 = vadd.f32 %v139, %v219
    %v221 = vpop.f32.mrb[0].mxu0
    %222 = vdwg.mxu0
    %223 = vst.msk [vmem:[#allocation2] sm:$0xff] %vm43, %v215
    %224 = vst.msk [vmem:[#allocation2 + $0x8] sm:$0xff] %vm43, %v220
    // Predicated region
    $region22: #{tpu_custom_call.1} parent=1 // pred_check
      _
    $region23: #{tpu_custom_call.1} parent=1 // pred_check_branch
      %226 = sbr.rel (0) target = $region25
    $region24: #{tpu_custom_call.1} parent=1 // pred_region
      %s228 = ssub.s32 256, 256
      %229 = vsyncadd [#allocation3], %s228
      %s230 = sshll.u32 [#allocation2], 4
      %s231 = int_to_ptr.vmem [resolvable:$true] %s230
      %236 = dma.vmem_to_hbm [thread:$0]  %s231, 256, %s5, [#allocation3], 128, 128, 8
    $region25: #{tpu_custom_call.1} parent=1 // pred_fallthru
      _
    // Predicated region
    $region26: #{tpu_custom_call.1} parent=1 // pred_check
      _
    $region27: #{tpu_custom_call.1} parent=1 // pred_check_branch
      %238 = sbr.rel (0) target = $region29
    $region28: #{tpu_custom_call.1} parent=1 // pred_region
      %239 = dma.done [#allocation3], 256
    $region29: #{tpu_custom_call.1} parent=1 // pred_fallthru
      _
    %240 = vsyncpa [#allocation3], 1

// kernel: tpu_custom_call.1
$region0: #{tpu_custom_call.1}
  #allocation0 [shape = 'u32[]', space=smem, size = 0x4, offset = 0x4, fixed_abs, tag = 'smem constant byte address 0x4 - core index']
  #allocation1 [shape = 'u32[144,128]{1,0:T(1,128)}', space=vmem, size = 0x12000, scoped, tag = 'internal scratch']
  %s0 = inlined_call_operand.vmem [shape: f32[16,32], index: 0, kind: input, shape index: {}]
  %s1 = inlined_call_operand.vmem [shape: f32[32,64], index: 1, kind: input, shape index: {}]
  %s2 = inlined_call_operand.vmem [shape: f32[1,64], index: 2, kind: input, shape index: {}]
  %s3 = inlined_call_operand.vmem [shape: f32[64,32], index: 3, kind: input, shape index: {}]
  %s4 = inlined_call_operand.vmem [shape: f32[1,32], index: 4, kind: input, shape index: {}]
  %s5 = inlined_call_operand.hbm [shape: f32[16,32], index: 5, kind: output, shape index: {}]
  %s6 = sld [smem:[#allocation0]]
  $region30: #{tpu_custom_call.1} parent=0
    _
  %s8 = ssub.s32 1, %s6
  %s9 = scalar_select 0, %s8, %s6
  $region1: #{tpu_custom_call.1} parent=0
    #allocation2 [shape = 'u8[8192]{0}', space=vmem, size = 0x2000, scoped, tag = 'output window, operand 0, single buffered']
    #allocation3 [shape = 's32[1]{0}', space=sflag, size = 0x4, scoped, tag = 'scoped memory for tpu_custom_call.1']
    %10 = vsyncpa [#allocation3], 0
    // Predicated region
    $region2: #{tpu_custom_call.1} parent=1 // pred_check
      _
    $region3: #{tpu_custom_call.1} parent=1 // pred_check_branch
      %12 = sbr.rel (0) target = $region5
    $region4: #{tpu_custom_call.1} parent=1 // pred_region
      _
    $region5: #{tpu_custom_call.1} parent=1 // pred_fallthru
      _
    // Predicated region
    $region6: #{tpu_custom_call.1} parent=1 // pred_check
      _
    $region7: #{tpu_custom_call.1} parent=1 // pred_check_branch
      %14 = sbr.rel (0) target = $region9
    $region8: #{tpu_custom_call.1} parent=1 // pred_region
      _
    $region9: #{tpu_custom_call.1} parent=1 // pred_fallthru
      _
    // Predicated region
    $region10: #{tpu_custom_call.1} parent=1 // pred_check
      _
    $region11: #{tpu_custom_call.1} parent=1 // pred_check_branch
      %16 = sbr.rel (0) target = $region13
    $region12: #{tpu_custom_call.1} parent=1 // pred_region
      _
    $region13: #{tpu_custom_call.1} parent=1 // pred_fallthru
      _
    // Predicated region
    $region14: #{tpu_custom_call.1} parent=1 // pred_check
      _
    $region15: #{tpu_custom_call.1} parent=1 // pred_check_branch
      %18 = sbr.rel (0) target = $region17
    $region16: #{tpu_custom_call.1} parent=1 // pred_region
      _
    $region17: #{tpu_custom_call.1} parent=1 // pred_fallthru
      _
    // Predicated region
    $region18: #{tpu_custom_call.1} parent=1 // pred_check
      _
    $region19: #{tpu_custom_call.1} parent=1 // pred_check_branch
      %20 = sbr.rel (0) target = $region21
    $region20: #{tpu_custom_call.1} parent=1 // pred_region
      _
    $region21: #{tpu_custom_call.1} parent=1 // pred_fallthru
      _
    %v21 = vld [vmem:[%s1] sm:$0xff]
    %v22 = vld [vmem:[%s1 + $0x8] sm:$0xff]
    %v23 = vld [vmem:[%s1 + $0x10] sm:$0xff]
    %v24 = vld [vmem:[%s1 + $0x18] sm:$0xff]
    %v25 = vld [vmem:[%s2] sm:$0x1]
    %v26 = vld [vmem:[%s3] sm:$0xff]
    %v27 = vld [vmem:[%s3 + $0x8] sm:$0xff]
    %v28 = vld [vmem:[%s3 + $0x10] sm:$0xff]
    %v29 = vld [vmem:[%s3 + $0x18] sm:$0xff]
    %v30 = vld [vmem:[%s3 + $0x20] sm:$0xff]
    %v31 = vld [vmem:[%s3 + $0x28] sm:$0xff]
    %v32 = vld [vmem:[%s3 + $0x30] sm:$0xff]
    %v33 = vld [vmem:[%s3 + $0x38] sm:$0xff]
    %v34 = vld [vmem:[%s4] sm:$0x1]
    %v35 = vld [vmem:[%s0] sm:$0xff]
    %v36 = vld [vmem:[%s0 + $0x8] sm:$0xff]
    %v38 = vlaneseq
    %v39 = vshrl.u32 %v38, 7
    %v40 = vsub.s32 0, %v39
    %v41 = vrot.slane %v25, %v40
    %vm43 = vcmask 261120
    %v45 = vsel %vm43, %v35, 0
    %v48 = vsel %vm43, %v36, 0
    %50 = vmatprep.subr.mxu0 0.0
    %51 = vmatpush1.msra.mxu0 %v21
    %52 = vmatprep.subr.mxu0 0.0
    %53 = vmatpush1.msra.mxu0 %v22
    %54 = vmatprep.subr.mxu0 0.0
    %55 = vmatpush1.msra.mxu0 %v23
    %56 = vmatprep.subr.mxu0 0.0
    %57 = vmatpush1.msra.mxu0 %v24
    %58 = vmatprep.subr.mxu0 0.0
    %59 = vmatpush1.msra.mxu0 0.0
    %60 = vmatprep.subr.mxu0 0.0
    %61 = vmatpush1.msra.mxu0 0.0
    %62 = vmatprep.subr.mxu0 0.0
    %63 = vmatpush1.msra.mxu0 0.0
    %64 = vmatprep.subr.mxu0 0.0
    %65 = vmatpush1.msra.mxu0 0.0
    %66 = vmatprep.subr.mxu0 0.0
    %67 = vmatpush1.msra.mxu0 0.0
    %68 = vmatprep.subr.mxu0 0.0
    %69 = vmatpush1.msra.mxu0 0.0
    %70 = vmatprep.subr.mxu0 0.0
    %71 = vmatpush1.msra.mxu0 0.0
    %72 = vmatprep.subr.mxu0 0.0
    %73 = vmatpush1.msra.mxu0 0.0
    %74 = vmatprep.subr.mxu0 0.0
    %75 = vmatpush1.msra.mxu0 0.0
    %76 = vmatprep.subr.mxu0 0.0
    %77 = vmatpush1.msra.mxu0 0.0
    %78 = vmatprep.subr.mxu0 0.0
    %79 = vmatpush1.msra.mxu0 0.0
    %80 = vmatprep.subr.mxu0 0.0
    %81 = vmatpush1.msra.mxu0 0.0
    %82 = vmatprep.subr.mxu0 0.0
    %83 = vmatpush1.msra.mxu0 0.0
    %84 = vmatprep.subr.mxu0 0.0
    %85 = vmatpush1.msra.mxu0 0.0
    %86 = vmatprep.subr.mxu0 0.0
    %87 = vmatpush1.msra.mxu0 0.0
    %88 = vmatprep.subr.mxu0 0.0
    %89 = vmatpush1.msra.mxu0 0.0
    %90 = vmatprep.subr.mxu0 0.0
    %91 = vmatpush1.msra.mxu0 0.0
    %92 = vmatprep.subr.mxu0 0.0
    %93 = vmatpush1.msra.mxu0 0.0
    %94 = vmatprep.subr.mxu0 0.0
    %95 = vmatpush1.msra.mxu0 0.0
    %96 = vmatprep.subr.mxu0 0.0
    %97 = vmatpush1.msra.mxu0 0.0
    %98 = vmatprep.subr.mxu0 0.0
    %99 = vmatpush1.msra.mxu0 0.0
    %100 = vmatprep.subr.mxu0 0.0
    %101 = vmatpush1.msra.mxu0 0.0
    %102 = vmatprep.subr.mxu0 0.0
    %103 = vmatpush1.msra.mxu0 0.0
    %104 = vmatprep.subr.mxu0 0.0
    %105 = vmatpush1.msra.mxu0 0.0
    %106 = vmatprep.subr.mxu0 0.0
    %107 = vmatpush1.msra.mxu0 0.0
    %108 = vmatprep.subr.mxu0 0.0
    %109 = vmatpush1.msra.mxu0 0.0
    %110 = vmatprep.subr.mxu0 0.0
    %111 = vmatpush1.msra.mxu0 0.0
    %112 = vmatprep.subr.mxu0 0.0
    %113 = vmatpush1.msra.mxu0 0.0
    %114 = vmatprep.mubr.f32.mxu0 0.0
    %115 = vmatmul.mubr.f32.gmra.mrb[0].mxu0 %v45
    %v116 = vpop.f32.mrb[0].mxu0
    %v117 = vadd.f32 %v41, %v116
    %v118 = vpop.f32.mrb[0].mxu0
    %119 = vmatprep.mubr.f32.mxu0 0.0
    %120 = vmatmul.mubr.f32.gmra.mrb[0].mxu0 %v48
    %v121 = vpop.f32.mrb[0].mxu0
    %v122 = vadd.f32 %v41, %v121
    %v123 = vpop.f32.mrb[0].mxu0
    %124 = vdwg.mxu0
    %v125 = vmul.f32 %v117, 0.5
    %v126 = vmul.f32 %v122, 0.5
    %v127 = vmul.f32 %v117, 0.70710677
    %v128 = vmul.f32 %v122, 0.70710677
    %v129 = verf.f32.pop %v127
    %v130 = verf.f32.pop %v128
    %v131 = vadd.f32 %v129, 1.0
    %v132 = vadd.f32 %v130, 1.0
    %v133 = vmul.f32 %v125, %v131
    %v134 = vmul.f32 %v126, %v132
    %v136 = vlaneseq
    %v137 = vshrl.u32 %v136, 7
    %v138 = vsub.s32 0, %v137
    %v139 = vrot.slane %v34, %v138
    %vm141 = vcmask 523264
    %v143 = vsel %vm141, %v133, 0
    %v146 = vsel %vm141, %v134, 0
    %148 = vmatprep.subr.mxu0 0.0
    %149 = vmatpush1.msra.mxu0 %v26
    %150 = vmatprep.subr.mxu0 0.0
    %151 = vmatpush1.msra.mxu0 %v27
    %152 = vmatprep.subr.mxu0 0.0
    %153 = vmatpush1.msra.mxu0 %v28
    %154 = vmatprep.subr.mxu0 0.0
    %155 = vmatpush1.msra.mxu0 %v29
    %156 = vmatprep.subr.mxu0 0.0
    %157 = vmatpush1.msra.mxu0 %v30
    %158 = vmatprep.subr.mxu0 0.0
    %159 = vmatpush1.msra.mxu0 %v31
    %160 = vmatprep.subr.mxu0 0.0
    %161 = vmatpush1.msra.mxu0 %v32
    %162 = vmatprep.subr.mxu0 0.0
    %163 = vmatpush1.msra.mxu0 %v33
    %164 = vmatprep.subr.mxu0 0.0
    %165 = vmatpush1.msra.mxu0 0.0
    %166 = vmatprep.subr.mxu0 0.0
    %167 = vmatpush1.msra.mxu0 0.0
    %168 = vmatprep.subr.mxu0 0.0
    %169 = vmatpush1.msra.mxu0 0.0
    %170 = vmatprep.subr.mxu0 0.0
    %171 = vmatpush1.msra.mxu0 0.0
    %172 = vmatprep.subr.mxu0 0.0
    %173 = vmatpush1.msra.mxu0 0.0
    %174 = vmatprep.subr.mxu0 0.0
    %175 = vmatpush1.msra.mxu0 0.0
    %176 = vmatprep.subr.mxu0 0.0
    %177 = vmatpush1.msra.mxu0 0.0
    %178 = vmatprep.subr.mxu0 0.0
    %179 = vmatpush1.msra.mxu0 0.0
    %180 = vmatprep.subr.mxu0 0.0
    %181 = vmatpush1.msra.mxu0 0.0
    %182 = vmatprep.subr.mxu0 0.0
    %183 = vmatpush1.msra.mxu0 0.0
    %184 = vmatprep.subr.mxu0 0.0
    %185 = vmatpush1.msra.mxu0 0.0
    %186 = vmatprep.subr.mxu0 0.0
    %187 = vmatpush1.msra.mxu0 0.0
    %188 = vmatprep.subr.mxu0 0.0
    %189 = vmatpush1.msra.mxu0 0.0
    %190 = vmatprep.subr.mxu0 0.0
    %191 = vmatpush1.msra.mxu0 0.0
    %192 = vmatprep.subr.mxu0 0.0
    %193 = vmatpush1.msra.mxu0 0.0
    %194 = vmatprep.subr.mxu0 0.0
    %195 = vmatpush1.msra.mxu0 0.0
    %196 = vmatprep.subr.mxu0 0.0
    %197 = vmatpush1.msra.mxu0 0.0
    %198 = vmatprep.subr.mxu0 0.0
    %199 = vmatpush1.msra.mxu0 0.0
    %200 = vmatprep.subr.mxu0 0.0
    %201 = vmatpush1.msra.mxu0 0.0
    %202 = vmatprep.subr.mxu0 0.0
    %203 = vmatpush1.msra.mxu0 0.0
    %204 = vmatprep.subr.mxu0 0.0
    %205 = vmatpush1.msra.mxu0 0.0
    %206 = vmatprep.subr.mxu0 0.0
    %207 = vmatpush1.msra.mxu0 0.0
    %208 = vmatprep.subr.mxu0 0.0
    %209 = vmatpush1.msra.mxu0 0.0
    %210 = vmatprep.subr.mxu0 0.0
    %211 = vmatpush1.msra.mxu0 0.0
    %212 = vmatprep.mubr.f32.mxu0 0.0
    %213 = vmatmul.mubr.f32.gmra.mrb[0].mxu0 %v143
    %v214 = vpop.f32.mrb[0].mxu0
    %v215 = vadd.f32 %v139, %v214
    %v216 = vpop.f32.mrb[0].mxu0
    %217 = vmatprep.mubr.f32.mxu0 0.0
    %218 = vmatmul.mubr.f32.gmra.mrb[0].mxu0 %v146
    %v219 = vpop.f32.mrb[0].mxu0
    %v220 = vadd.f32 %v139, %v219
    %v221 = vpop.f32.mrb[0].mxu0
    %222 = vdwg.mxu0
    %223 = vst.msk [vmem:[#allocation2] sm:$0xff] %vm43, %v215
    %224 = vst.msk [vmem:[#allocation2 + $0x8] sm:$0xff] %vm43, %v220
    // Predicated region
    $region22: #{tpu_custom_call.1} parent=1 // pred_check
      _
    $region23: #{tpu_custom_call.1} parent=1 // pred_check_branch
      %226 = sbr.rel (0) target = $region25
    $region24: #{tpu_custom_call.1} parent=1 // pred_region
      %s228 = ssub.s32 256, 256
      %229 = vsyncadd [#allocation3], %s228
      %s230 = sshll.u32 [#allocation2], 4
      %s231 = int_to_ptr.vmem [resolvable:$true] %s230
      %236 = dma.vmem_to_hbm [thread:$0]  %s231, 256, %s5, [#allocation3], 128, 128, 8
    $region25: #{tpu_custom_call.1} parent=1 // pred_fallthru
      _
    // Predicated region
    $region26: #{tpu_custom_call.1} parent=1 // pred_check
      _
    $region27: #{tpu_custom_call.1} parent=1 // pred_check_branch
      %238 = sbr.rel (0) target = $region29
    $region28: #{tpu_custom_call.1} parent=1 // pred_region
      %239 = dma.done [#allocation3], 256
    $region29: #{tpu_custom_call.1} parent=1 // pred_fallthru
      _
    %240 = vsyncpa [#allocation3], 1

</llo_original>
